<compile_context>
chip_gen: v6e
topology: v6e:2x2x1
jax: 0.10.0
libtpu: 0.0.40
codegen_flags: <defaults>
</compile_context>

<pallas_src>
import jax
import jax.numpy as jnp
from jax.experimental import pallas as pl
from jax.experimental.pallas import tpu as pltpu

INPUT_SIZE = 480          # matches mean_embeddings_esm2_t12.csv (cols 0:480)
HIDDEN_SIZE = 128
NUM_CLASSES_TASK1 = 4
NUM_CLASSES_TASK2 = 3


def _round_up(v, m):
    return ((v + m - 1) // m) * m


def _mlt_mlp_kernel(x_ref, w1_ref, b1_ref, wh_ref, bh_ref, out_ref):
    # fc1: cast the f32 x tile to bf16 in-register (VPU), bf16 x bf16 -> f32
    # accumulation on the MXU, then bias + ReLU in f32.
    x_bf = x_ref[...].astype(jnp.bfloat16)
    h = jnp.dot(x_bf, w1_ref[...],
                preferred_element_type=jnp.float32) + b1_ref[...]
    h = jnp.maximum(h, 0.0)
    # TODO(synk): dropout is identity in eval mode; training-mode mask/scale
    # (pltpu.prng_random_bits) not implemented here.

    # Fused task heads: one bf16 matmul into the 8 (= C1+C2 padded) logit
    # columns; only 32 B/row goes back to HBM.
    logits = jnp.dot(h.astype(jnp.bfloat16), wh_ref[...],
                     preferred_element_type=jnp.float32) + bh_ref[...]
    out_ref[...] = logits.astype(out_ref.dtype)


def prepare_mlt_mlp_params(params):
    """One-time parameter prep, hoisted out of the per-call path.

    params: (w1 [F,H], b1 [1,H], wt1 [H,C1], bt1 [1,C1], wt2 [H,C2], bt2 [1,C2])
    (weights stored as [in_features, out_features], i.e. transposed relative to
    PyTorch nn.Linear, so the kernel does plain x @ W + b.)
    """
    w1, b1, wt1, bt1, wt2, bt2 = params
    H = w1.shape[1]
    C1 = wt1.shape[1]
    C2 = wt2.shape[1]
    c_pad = _round_up(C1 + C2, 8)                       # 7 -> 8 logit columns
    wh = jnp.zeros((H, c_pad), jnp.float32)
    wh = wh.at[:, :C1].set(wt1).at[:, C1:C1 + C2].set(wt2)
    bh = jnp.zeros((1, c_pad), jnp.float32)
    bh = bh.at[:, :C1].set(bt1).at[:, C1:C1 + C2].set(bt2)
    arrays = (w1.astype(jnp.bfloat16),                  # fc1 W   [F, H]   bf16
              b1.astype(jnp.float32),                   # fc1 b   [1, H]   f32
              wh.astype(jnp.bfloat16),                  # heads W [H, 8]   bf16
              bh)                                       # heads b [1, 8]   f32
    return arrays, (C1, C2)


def mlt_mlp_forward(x, prepared, *, bm=2048):
    """Forward pass of mltMLP. x: [B, INPUT_SIZE] float32.

    Returns (out_task1 [B, C1], out_task2 [B, C2]) in float32.
    """
    (w1_bf, b1_f, wh_bf, bh_f), (C1, C2) = prepared
    B, F = x.shape
    H = w1_bf.shape[1]
    c_pad = wh_bf.shape[1]

    # Batch tiling: tiny B -> single block (block dims equal to full array dims
    # are always legal).  Larger B -> at least 4 tiles so v7x's two TensorCores
    # both get work on the "parallel" grid axis, capped at bm rows per tile.
    if B <= 64:
        bm_eff = B
    else:
        bm_eff = min(bm, _round_up(pl.cdiv(B, 4), 8))
    grid = (pl.cdiv(B, bm_eff),)

    cost = pl.CostEstimate(
        flops=2 * B * (F * H + H * c_pad),
        transcendentals=0,
        bytes_accessed=(B * F * 4 + B * c_pad * 4          # x read + logits write
                        + F * H * 2 + H * 4                # fc1 W (bf16) + b (f32)
                        + H * c_pad * 2 + c_pad * 4),      # head W (bf16) + b (f32)
    )

    # Constant index_map -> weights never change across grid steps; single
    # buffer is enough (frees a little VMEM headroom, esp. on v7x's 64 MiB).
    resident = dict(pipeline_mode=pl.Buffered(1))

    out = pl.pallas_call(
        _mlt_mlp_kernel,
        out_shape=jax.ShapeDtypeStruct((B, c_pad), jnp.float32),
        grid_spec=pltpu.PrefetchScalarGridSpec(
            num_scalar_prefetch=0,
            grid=grid,
            in_specs=[
                pl.BlockSpec((bm_eff, F), lambda i: (i, 0)),              # x tile (streamed)
                pl.BlockSpec((F, H), lambda i: (0, 0), **resident),       # fc1 W
                pl.BlockSpec((1, H), lambda i: (0, 0), **resident),       # fc1 b
                pl.BlockSpec((H, c_pad), lambda i: (0, 0), **resident),   # fused head W
                pl.BlockSpec((1, c_pad), lambda i: (0, 0), **resident),   # fused head b
            ],
            out_specs=pl.BlockSpec((bm_eff, c_pad), lambda i: (i, 0)),
        ),
        compiler_params=pltpu.CompilerParams(
            dimension_semantics=("parallel",)),
        cost_estimate=cost,
    )(x, w1_bf, b1_f, wh_bf, bh_f)

    # Slice the two task logits out of the 8-wide fused output.
    return out[:, :C1], out[:, C1:C1 + C2]


def init_params(key, input_size, hidden_size, nc1, nc2):
    """Deterministic synthetic parameters (shapes match the nn.Module)."""
    k1, k2, k3, k4, k5, k6 = jax.random.split(key, 6)
    s1 = 1.0 / jnp.sqrt(input_size)
    s2 = 1.0 / jnp.sqrt(hidden_size)
    w1 = jax.random.uniform(k1, (input_size, hidden_size), jnp.float32, -s1, s1)
    b1 = jax.random.uniform(k2, (1, hidden_size), jnp.float32, -s1, s1)
    wt1 = jax.random.uniform(k3, (hidden_size, nc1), jnp.float32, -s2, s2)
    bt1 = jax.random.uniform(k4, (1, nc1), jnp.float32, -s2, s2)
    wt2 = jax.random.uniform(k5, (hidden_size, nc2), jnp.float32, -s2, s2)
    bt2 = jax.random.uniform(k6, (1, nc2), jnp.float32, -s2, s2)
    return (w1, b1, wt1, bt1, wt2, bt2)


if __name__ == "__main__":
    key = jax.random.PRNGKey(0)
    kx, kp = jax.random.split(key)

    B = 8
    x = jax.random.normal(kx, (B, INPUT_SIZE), jnp.float32)
    params = init_params(kp, INPUT_SIZE, HIDDEN_SIZE,
                         NUM_CLASSES_TASK1, NUM_CLASSES_TASK2)
    prepared = prepare_mlt_mlp_params(params)

    out_task1, out_task2 = mlt_mlp_forward(x, prepared)
    jax.block_until_ready((out_task1, out_task2))

    # Pure-JAX reference matching the kernel's precision (bf16 matmul inputs,
    # f32 accumulation, f32 bias/ReLU).
    w1, b1, wt1, bt1, wt2, bt2 = params
    x32 = x.astype(jnp.bfloat16).astype(jnp.float32)
    w132 = w1.astype(jnp.bfloat16).astype(jnp.float32)
    h_ref = jnp.maximum(x32 @ w132 + b1, 0.0)
    h32 = h_ref.astype(jnp.bfloat16).astype(jnp.float32)
    ref1 = h32 @ wt1.astype(jnp.bfloat16).astype(jnp.float32) + bt1
    ref2 = h32 @ wt2.astype(jnp.bfloat16).astype(jnp.float32) + bt2

    assert out_task1.shape == (B, NUM_CLASSES_TASK1)
    assert out_task2.shape == (B, NUM_CLASSES_TASK2)
    assert jnp.allclose(out_task1, ref1, atol=2e-3), \
        float(jnp.max(jnp.abs(out_task1 - ref1)))
    assert jnp.allclose(out_task2, ref2, atol=2e-3), \
        float(jnp.max(jnp.abs(out_task2 - ref2)))

    print("KERNEL_OK")
</pallas_src>

<mosaic_0001>
module attributes {stable_mosaic.version = 11 : i64} {
  func.func @_mlt_mlp_kernel(%arg0: i32, %arg1: memref<8x480xf32, #tpu.memory_space<vmem>>, %arg2: memref<480x128xbf16, #tpu.memory_space<vmem>>, %arg3: memref<1x128xf32, #tpu.memory_space<vmem>>, %arg4: memref<128x8xbf16, #tpu.memory_space<vmem>>, %arg5: memref<1x8xf32, #tpu.memory_space<vmem>>, %arg6: memref<8x8xf32, #tpu.memory_space<vmem>>) attributes {dimension_semantics = [#tpu.dimension_semantics<parallel>], iteration_bounds = array<i64: 1>, scalar_prefetch = 0 : i64, scratch_operands = 0 : i64, tpu.core_type = #tpu.core_type<tc>, window_params = [{transform_indices = @transform_0, window_bounds = array<i64: 8, 480>}, {pipeline_mode = #tpu.pipeline_mode<synchronous>, transform_indices = @transform_1, window_bounds = array<i64: 480, 128>}, {pipeline_mode = #tpu.pipeline_mode<synchronous>, transform_indices = @transform_2, window_bounds = array<i64: 1, 128>}, {pipeline_mode = #tpu.pipeline_mode<synchronous>, transform_indices = @transform_3, window_bounds = array<i64: 128, 8>}, {pipeline_mode = #tpu.pipeline_mode<synchronous>, transform_indices = @transform_4, window_bounds = array<i64: 1, 8>}, {transform_indices = @transform_5, window_bounds = array<i64: 8, 8>}]} {
    %c0 = arith.constant 0 : index
    %c0_0 = arith.constant 0 : index
    %0 = vector.load %arg1[%c0, %c0_0] : memref<8x480xf32, #tpu.memory_space<vmem>>, vector<8x480xf32>
    %1 = arith.truncf %0 : vector<8x480xf32> to vector<8x480xbf16>
    %c0_1 = arith.constant 0 : index
    %c0_2 = arith.constant 0 : index
    %2 = vector.load %arg2[%c0_1, %c0_2] : memref<480x128xbf16, #tpu.memory_space<vmem>>, vector<480x128xbf16>
    %cst = arith.constant dense<0.000000e+00> : vector<8x128xf32>
    %3 = tpu.matmul %1, %2, %cst {dimension_numbers = #tpu.dot_dimension_numbers<[1], [0], [0], [1], [0, 0, 1, 1], [], []>} : vector<8x480xbf16>, vector<480x128xbf16>, vector<8x128xf32> -> vector<8x128xf32>
    %c0_3 = arith.constant 0 : index
    %c0_4 = arith.constant 0 : index
    %4 = vector.load %arg3[%c0_3, %c0_4] : memref<1x128xf32, #tpu.memory_space<vmem>>, vector<1x128xf32>
    %5 = vector.broadcast %4 : vector<1x128xf32> to vector<8x128xf32>
    %6 = arith.addf %3, %5 : vector<8x128xf32>
    %cst_5 = arith.constant 0.000000e+00 : f32
    %7 = vector.broadcast %cst_5 : f32 to vector<8x128xf32>
    %8 = arith.maximumf %6, %7 : vector<8x128xf32>
    %9 = arith.truncf %8 : vector<8x128xf32> to vector<8x128xbf16>
    %c0_6 = arith.constant 0 : index
    %c0_7 = arith.constant 0 : index
    %10 = vector.load %arg4[%c0_6, %c0_7] : memref<128x8xbf16, #tpu.memory_space<vmem>>, vector<128x8xbf16>
    %cst_8 = arith.constant dense<0.000000e+00> : vector<8x8xf32>
    %11 = tpu.matmul %9, %10, %cst_8 {dimension_numbers = #tpu.dot_dimension_numbers<[1], [0], [0], [1], [0, 0, 1, 1], [], []>} : vector<8x128xbf16>, vector<128x8xbf16>, vector<8x8xf32> -> vector<8x8xf32>
    %c0_9 = arith.constant 0 : index
    %c0_10 = arith.constant 0 : index
    %12 = vector.load %arg5[%c0_9, %c0_10] : memref<1x8xf32, #tpu.memory_space<vmem>>, vector<1x8xf32>
    %13 = vector.broadcast %12 : vector<1x8xf32> to vector<8x8xf32>
    %14 = arith.addf %11, %13 : vector<8x8xf32>
    %c0_11 = arith.constant 0 : index
    %c0_12 = arith.constant 0 : index
    %15 = vector.load %arg6[%c0_11, %c0_12] : memref<8x8xf32, #tpu.memory_space<vmem>>, vector<8x8xf32>
    tpu.vector_store %arg6[%c0_11, %c0_12], %14 {strides = array<i32>} : memref<8x8xf32, #tpu.memory_space<vmem>>, vector<8x8xf32>,
    return
  }
  func.func @transform_0(%arg0: i32) -> (i32, i32) {
    %c0_i32 = arith.constant 0 : i32
    %c0_i32_0 = arith.constant 0 : i32
    return %arg0, %c0_i32 : i32, i32
  }
  func.func @transform_1(%arg0: i32) -> (i32, i32) {
    %c0_i32 = arith.constant 0 : i32
    %c0_i32_0 = arith.constant 0 : i32
    %c0_i32_1 = arith.constant 0 : i32
    return %c0_i32, %c0_i32_0 : i32, i32
  }
  func.func @transform_2(%arg0: i32) -> (i32, i32) {
    %c0_i32 = arith.constant 0 : i32
    %c0_i32_0 = arith.constant 0 : i32
    %c0_i32_1 = arith.constant 0 : i32
    return %c0_i32, %c0_i32_0 : i32, i32
  }
  func.func @transform_3(%arg0: i32) -> (i32, i32) {
    %c0_i32 = arith.constant 0 : i32
    %c0_i32_0 = arith.constant 0 : i32
    %c0_i32_1 = arith.constant 0 : i32
    return %c0_i32, %c0_i32_0 : i32, i32
  }
  func.func @transform_4(%arg0: i32) -> (i32, i32) {
    %c0_i32 = arith.constant 0 : i32
    %c0_i32_0 = arith.constant 0 : i32
    %c0_i32_1 = arith.constant 0 : i32
    return %c0_i32, %c0_i32_0 : i32, i32
  }
  func.func @transform_5(%arg0: i32) -> (i32, i32) {
    %c0_i32 = arith.constant 0 : i32
    %c0_i32_0 = arith.constant 0 : i32
    return %arg0, %c0_i32 : i32, i32
  }
}

</mosaic_0001>

<llo_original>
// kernel: tpu_custom_call.1
$region0: #{tpu_custom_call.1}
  #allocation0 [shape = 'u32[]', space=smem, size = 0x4, offset = 0x4, fixed_abs, tag = 'smem constant byte address 0x4 - core index']
  #allocation1 [shape = 'u32[144,128]{1,0:T(1,128)}', space=vmem, size = 0x12000, scoped, tag = 'internal scratch']
  %s0 = inlined_call_operand.vmem [shape: f32[8,480], index: 0, kind: input, shape index: {}]
  %s1 = inlined_call_operand.hbm [shape: bf16[480,128], index: 1, kind: input, shape index: {}]
  %s2 = inlined_call_operand.vmem [shape: f32[1,128], index: 2, kind: input, shape index: {}]
  %s3 = inlined_call_operand.vmem [shape: bf16[128,8], index: 3, kind: input, shape index: {}]
  %s4 = inlined_call_operand.vmem [shape: f32[1,8], index: 4, kind: input, shape index: {}]
  %s5 = inlined_call_operand.hbm [shape: f32[8,8], index: 5, kind: output, shape index: {}]
  %s6 = sld [smem:[#allocation0]]
  $region34: #{tpu_custom_call.1} parent=0
    _
  %s8 = ssub.s32 1, %s6
  %s9 = scalar_select 0, %s8, %s6
  $region1: #{tpu_custom_call.1} parent=0
    #allocation2 [shape = 'u8[122880]{0}', space=vmem, size = 0x1e000, scoped, tag = 'input window, operand 1, single buffered']
    #allocation3 [shape = 's32[1]{0}', space=sflag, size = 0x4, scoped, tag = 'scoped memory for tpu_custom_call.1']
    #allocation4 [shape = 's32[1]{0}', space=sflag, size = 0x4, scoped, tag = 'scoped memory for tpu_custom_call.1']
    #allocation5 [shape = 'u8[4096]{0}', space=vmem, size = 0x1000, scoped, tag = 'output window, operand 0, single buffered']
    %10 = vsyncpa [#allocation3], 0
    %11 = vsyncpa [#allocation4], 0
    // Predicated region
    $region2: #{tpu_custom_call.1} parent=1 // pred_check
      _
    $region3: #{tpu_custom_call.1} parent=1 // pred_check_branch
      %13 = sbr.rel (0) target = $region5
    $region4: #{tpu_custom_call.1} parent=1 // pred_region
      _
    $region5: #{tpu_custom_call.1} parent=1 // pred_fallthru
      _
    // Predicated region
    $region6: #{tpu_custom_call.1} parent=1 // pred_check
      _
    $region7: #{tpu_custom_call.1} parent=1 // pred_check_branch
      %15 = sbr.rel (0) target = $region9
    $region8: #{tpu_custom_call.1} parent=1 // pred_region
      %s17 = ssub.s32 3840, 3840
      %18 = vsyncadd [#allocation3], %s17
      %s19 = sshll.u32 [#allocation2], 4
      %s20 = int_to_ptr.vmem [resolvable:$true] %s19
      %25 = dma.hbm_to_vmem [thread:$0]  %s1, 3840, %s20, [#allocation3], 64, 64, 4
    $region9: #{tpu_custom_call.1} parent=1 // pred_fallthru
      _
    // Predicated region
    $region10: #{tpu_custom_call.1} parent=1 // pred_check
      _
    $region11: #{tpu_custom_call.1} parent=1 // pred_check_branch
      %27 = sbr.rel (0) target = $region13
    $region12: #{tpu_custom_call.1} parent=1 // pred_region
      _
    $region13: #{tpu_custom_call.1} parent=1 // pred_fallthru
      _
    // Predicated region
    $region14: #{tpu_custom_call.1} parent=1 // pred_check
      _
    $region15: #{tpu_custom_call.1} parent=1 // pred_check_branch
      %29 = sbr.rel (0) target = $region17
    $region16: #{tpu_custom_call.1} parent=1 // pred_region
      _
    $region17: #{tpu_custom_call.1} parent=1 // pred_fallthru
      _
    // Predicated region
    $region18: #{tpu_custom_call.1} parent=1 // pred_check
      _
    $region19: #{tpu_custom_call.1} parent=1 // pred_check_branch
      %31 = sbr.rel (0) target = $region21
    $region20: #{tpu_custom_call.1} parent=1 // pred_region
      _
    $region21: #{tpu_custom_call.1} parent=1 // pred_fallthru
      _
    // Predicated region
    $region22: #{tpu_custom_call.1} parent=1 // pred_check
      _
    $region23: #{tpu_custom_call.1} parent=1 // pred_check_branch
      %33 = sbr.rel (0) target = $region25
    $region24: #{tpu_custom_call.1} parent=1 // pred_region
      %34 = dma.done [#allocation3], 3840
    $region25: #{tpu_custom_call.1} parent=1 // pred_fallthru
      _
    %v36 = vld [vmem:[%s0] sm:$0xff]
    %v37 = vld [vmem:[%s0 + $0x8] sm:$0xff]
    %v38 = vld [vmem:[%s0 + $0x10] sm:$0xff]
    %v39 = vld [vmem:[%s0 + $0x18] sm:$0xff]
    %v40 = vpack.c.bf16 %v36, %v36
    %v41 = vpack.c.bf16 %v37, %v37
    %v42 = vpack.c.bf16 %v38, %v38
    %v43 = vpack.c.bf16 %v39, %v39
    %v44 = vld [vmem:[#allocation2] sm:$0xf]
    %v45 = vld [vmem:[#allocation2 + $0x4] sm:$0xf]
    %v46 = vld [vmem:[#allocation2 + $0x8] sm:$0xf]
    %v47 = vld [vmem:[#allocation2 + $0xc] sm:$0xf]
    %v48 = vld [vmem:[#allocation2 + $0x10] sm:$0xf]
    %v49 = vld [vmem:[#allocation2 + $0x14] sm:$0xf]
    %v50 = vld [vmem:[#allocation2 + $0x18] sm:$0xf]
    %v51 = vld [vmem:[#allocation2 + $0x1c] sm:$0xf]
    %v52 = vld [vmem:[#allocation2 + $0x20] sm:$0xf]
    %v53 = vld [vmem:[#allocation2 + $0x24] sm:$0xf]
    %v54 = vld [vmem:[#allocation2 + $0x28] sm:$0xf]
    %v55 = vld [vmem:[#allocation2 + $0x2c] sm:$0xf]
    %v56 = vld [vmem:[#allocation2 + $0x30] sm:$0xf]
    %v57 = vld [vmem:[#allocation2 + $0x34] sm:$0xf]
    %v58 = vld [vmem:[#allocation2 + $0x38] sm:$0xf]
    %v59 = vld [vmem:[#allocation2 + $0x3c] sm:$0xf]
    %v60 = vld [vmem:[#allocation2 + $0x40] sm:$0xf]
    %v61 = vld [vmem:[#allocation2 + $0x44] sm:$0xf]
    %v62 = vld [vmem:[#allocation2 + $0x48] sm:$0xf]
    %v63 = vld [vmem:[#allocation2 + $0x4c] sm:$0xf]
    %v64 = vld [vmem:[#allocation2 + $0x50] sm:$0xf]
    %v65 = vld [vmem:[#allocation2 + $0x54] sm:$0xf]
    %v66 = vld [vmem:[#allocation2 + $0x58] sm:$0xf]
    %v67 = vld [vmem:[#allocation2 + $0x5c] sm:$0xf]
    %v68 = vld [vmem:[#allocation2 + $0x60] sm:$0xf]
    %v69 = vld [vmem:[#allocation2 + $0x64] sm:$0xf]
    %v70 = vld [vmem:[#allocation2 + $0x68] sm:$0xf]
    %v71 = vld [vmem:[#allocation2 + $0x6c] sm:$0xf]
    %v72 = vld [vmem:[#allocation2 + $0x70] sm:$0xf]
    %v73 = vld [vmem:[#allocation2 + $0x74] sm:$0xf]
    %v74 = vld [vmem:[#allocation2 + $0x78] sm:$0xf]
    %v75 = vld [vmem:[#allocation2 + $0x7c] sm:$0xf]
    %v76 = vld [vmem:[#allocation2 + $0x80] sm:$0xf]
    %v77 = vld [vmem:[#allocation2 + $0x84] sm:$0xf]
    %v78 = vld [vmem:[#allocation2 + $0x88] sm:$0xf]
    %v79 = vld [vmem:[#allocation2 + $0x8c] sm:$0xf]
    %v80 = vld [vmem:[#allocation2 + $0x90] sm:$0xf]
    %v81 = vld [vmem:[#allocation2 + $0x94] sm:$0xf]
    %v82 = vld [vmem:[#allocation2 + $0x98] sm:$0xf]
    %v83 = vld [vmem:[#allocation2 + $0x9c] sm:$0xf]
    %v84 = vld [vmem:[#allocation2 + $0xa0] sm:$0xf]
    %v85 = vld [vmem:[#allocation2 + $0xa4] sm:$0xf]
    %v86 = vld [vmem:[#allocation2 + $0xa8] sm:$0xf]
    %v87 = vld [vmem:[#allocation2 + $0xac] sm:$0xf]
    %v88 = vld [vmem:[#allocation2 + $0xb0] sm:$0xf]
    %v89 = vld [vmem:[#allocation2 + $0xb4] sm:$0xf]
    %v90 = vld [vmem:[#allocation2 + $0xb8] sm:$0xf]
    %v91 = vld [vmem:[#allocation2 + $0xbc] sm:$0xf]
    %v92 = vld [vmem:[#allocation2 + $0xc0] sm:$0xf]
    %v93 = vld [vmem:[#allocation2 + $0xc4] sm:$0xf]
    %v94 = vld [vmem:[#allocation2 + $0xc8] sm:$0xf]
    %v95 = vld [vmem:[#allocation2 + $0xcc] sm:$0xf]
    %v96 = vld [vmem:[#allocation2 + $0xd0] sm:$0xf]
    %v97 = vld [vmem:[#allocation2 + $0xd4] sm:$0xf]
    %v98 = vld [vmem:[#allocation2 + $0xd8] sm:$0xf]
    %v99 = vld [vmem:[#allocation2 + $0xdc] sm:$0xf]
    %v100 = vld [vmem:[#allocation2 + $0xe0] sm:$0xf]
    %v101 = vld [vmem:[#allocation2 + $0xe4] sm:$0xf]
    %v102 = vld [vmem:[#allocation2 + $0xe8] sm:$0xf]
    %v103 = vld [vmem:[#allocation2 + $0xec] sm:$0xf]
    %v104 = vld [vmem:[%s2] sm:$0x1]
    %v106 = vlaneseq
    %v107 = vshrl.u32 %v106, 7
    %v108 = vsub.s32 0, %v107
    %v109 = vrot.slane %v104, %v108
    %v171 = vunpack.c.l.b16 %v44
    %v172 = vunpack.c.l.b16 %v45
    %v173 = vunpack.c.l.b16 %v46
    %v174 = vunpack.c.l.b16 %v47
    %v175 = vunpack.c.l.b16 %v48
    %v176 = vunpack.c.l.b16 %v49
    %v177 = vunpack.c.l.b16 %v50
    %v178 = vunpack.c.l.b16 %v51
    %v179 = vunpack.c.l.b16 %v52
    %v180 = vunpack.c.l.b16 %v53
    %v181 = vunpack.c.l.b16 %v54
    %v182 = vunpack.c.l.b16 %v55
    %v183 = vunpack.c.l.b16 %v56
    %v184 = vunpack.c.l.b16 %v57
    %v185 = vunpack.c.l.b16 %v58
    %v186 = vunpack.c.l.b16 %v59
    %v187 = vunpack.c.l.b16 %v60
    %v188 = vunpack.c.l.b16 %v61
    %v189 = vunpack.c.l.b16 %v62
    %v190 = vunpack.c.l.b16 %v63
    %v191 = vunpack.c.l.b16 %v64
    %v192 = vunpack.c.l.b16 %v65
    %v193 = vunpack.c.l.b16 %v66
    %v194 = vunpack.c.l.b16 %v67
    %v195 = vunpack.c.l.b16 %v68
    %v196 = vunpack.c.l.b16 %v69
    %v197 = vunpack.c.l.b16 %v70
    %v198 = vunpack.c.l.b16 %v71
    %v199 = vunpack.c.l.b16 %v72
    %v200 = vunpack.c.l.b16 %v73
    %v201 = vunpack.c.l.b16 %v74
    %v202 = vunpack.c.l.b16 %v75
    %v203 = vunpack.c.l.b16 %v76
    %v204 = vunpack.c.l.b16 %v77
    %v205 = vunpack.c.l.b16 %v78
    %v206 = vunpack.c.l.b16 %v79
    %v207 = vunpack.c.l.b16 %v80
    %v208 = vunpack.c.l.b16 %v81
    %v209 = vunpack.c.l.b16 %v82
    %v210 = vunpack.c.l.b16 %v83
    %v211 = vunpack.c.l.b16 %v84
    %v212 = vunpack.c.l.b16 %v85
    %v213 = vunpack.c.l.b16 %v86
    %v214 = vunpack.c.l.b16 %v87
    %v215 = vunpack.c.l.b16 %v88
    %v216 = vunpack.c.l.b16 %v89
    %v217 = vunpack.c.l.b16 %v90
    %v218 = vunpack.c.l.b16 %v91
    %v219 = vunpack.c.l.b16 %v92
    %v220 = vunpack.c.l.b16 %v93
    %v221 = vunpack.c.l.b16 %v94
    %v222 = vunpack.c.l.b16 %v95
    %v223 = vunpack.c.l.b16 %v96
    %v224 = vunpack.c.l.b16 %v97
    %v225 = vunpack.c.l.b16 %v98
    %v226 = vunpack.c.l.b16 %v99
    %v227 = vunpack.c.l.b16 %v100
    %v228 = vunpack.c.l.b16 %v101
    %v229 = vunpack.c.l.b16 %v102
    %v230 = vunpack.c.l.b16 %v103
    %v231 = vpack.c.b16 %v172, %v171
    %v232 = vpack.c.b16 %v174, %v173
    %v233 = vpack.c.b16 %v176, %v175
    %v234 = vpack.c.b16 %v178, %v177
    %v235 = vpack.c.b16 %v180, %v179
    %v236 = vpack.c.b16 %v182, %v181
    %v237 = vpack.c.b16 %v184, %v183
    %v238 = vpack.c.b16 %v186, %v185
    %v239 = vpack.c.b16 %v188, %v187
    %v240 = vpack.c.b16 %v190, %v189
    %v241 = vpack.c.b16 %v192, %v191
    %v242 = vpack.c.b16 %v194, %v193
    %v243 = vpack.c.b16 %v196, %v195
    %v244 = vpack.c.b16 %v198, %v197
    %v245 = vpack.c.b16 %v200, %v199
    %v246 = vpack.c.b16 %v202, %v201
    %v247 = vpack.c.b16 %v204, %v203
    %v248 = vpack.c.b16 %v206, %v205
    %v249 = vpack.c.b16 %v208, %v207
    %v250 = vpack.c.b16 %v210, %v209
    %v251 = vpack.c.b16 %v212, %v211
    %v252 = vpack.c.b16 %v214, %v213
    %v253 = vpack.c.b16 %v216, %v215
    %v254 = vpack.c.b16 %v218, %v217
    %v255 = vpack.c.b16 %v220, %v219
    %v256 = vpack.c.b16 %v222, %v221
    %v257 = vpack.c.b16 %v224, %v223
    %v258 = vpack.c.b16 %v226, %v225
    %v259 = vpack.c.b16 %v228, %v227
    %v260 = vpack.c.b16 %v230, %v229
    %vm291 = vcmask 785408
    %v293 = vsel %vm291, %v43, 0
    %295 = vmatprep.subr.bf16.mxu0 0
    %296 = vmatpush1.bf16.msra.mxu0 %v238
    %297 = vmatprep.subr.bf16.mxu0 0
    %298 = vmatpush1.bf16.msra.mxu0 %v237
    %299 = vmatprep.subr.bf16.mxu0 0
    %300 = vmatpush1.bf16.msra.mxu0 %v236
    %301 = vmatprep.subr.bf16.mxu0 0
    %302 = vmatpush1.bf16.msra.mxu0 %v235
    %303 = vmatprep.subr.bf16.mxu0 0
    %304 = vmatpush1.bf16.msra.mxu0 %v234
    %305 = vmatprep.subr.bf16.mxu0 0
    %306 = vmatpush1.bf16.msra.mxu0 %v233
    %307 = vmatprep.subr.bf16.mxu0 0
    %308 = vmatpush1.bf16.msra.mxu0 %v232
    %309 = vmatprep.subr.bf16.mxu0 0
    %310 = vmatpush1.bf16.msra.mxu0 %v231
    %311 = vmatprep.subr.bf16.mxu0 0
    %312 = vmatpush2.bf16.msra.mxu0 %v246
    %313 = vmatprep.subr.bf16.mxu0 0
    %314 = vmatpush2.bf16.msra.mxu0 %v245
    %315 = vmatprep.subr.bf16.mxu0 0
    %316 = vmatpush2.bf16.msra.mxu0 %v244
    %317 = vmatprep.subr.bf16.mxu0 0
    %318 = vmatpush2.bf16.msra.mxu0 %v243
    %319 = vmatprep.subr.bf16.mxu0 0
    %320 = vmatpush2.bf16.msra.mxu0 %v242
    %321 = vmatprep.subr.bf16.mxu0 0
    %322 = vmatpush2.bf16.msra.mxu0 %v241
    %323 = vmatprep.subr.bf16.mxu0 0
    %324 = vmatpush2.bf16.msra.mxu0 %v240
    %325 = vmatprep.subr.bf16.mxu0 0
    %326 = vmatpush2.bf16.msra.mxu0 %v239
    %327 = vmatprep.mubr.bf16.mxu0 %v41
    %328 = vmatmul.mubr.bf16.gmra.mxu0 %v40
    %v329 = vpop.f32.mrf.mxu0
    %v330 = vadd.f32 %v109, %v329
    %v331 = vpop.f32.mrf.mxu0
    %v332 = vpop.f32.mrf.mxu0
    %v333 = vpop.f32.mrf.mxu0
    %334 = vdwg.mxu0
    %335 = vmatprep.subr.bf16.mxu0 0
    %336 = vmatpush1.bf16.msra.mxu0 %v254
    %337 = vmatprep.subr.bf16.mxu0 0
    %338 = vmatpush1.bf16.msra.mxu0 %v253
    %339 = vmatprep.subr.bf16.mxu0 0
    %340 = vmatpush1.bf16.msra.mxu0 %v252
    %341 = vmatprep.subr.bf16.mxu0 0
    %342 = vmatpush1.bf16.msra.mxu0 %v251
    %343 = vmatprep.subr.bf16.mxu0 0
    %344 = vmatpush1.bf16.msra.mxu0 %v250
    %345 = vmatprep.subr.bf16.mxu0 0
    %346 = vmatpush1.bf16.msra.mxu0 %v249
    %347 = vmatprep.subr.bf16.mxu0 0
    %348 = vmatpush1.bf16.msra.mxu0 %v248
    %349 = vmatprep.subr.bf16.mxu0 0
    %350 = vmatpush1.bf16.msra.mxu0 %v247
    %351 = vmatprep.subr.bf16.mxu0 0
    %352 = vmatpush2.bf16.msra.mxu0 0
    %353 = vmatprep.subr.bf16.mxu0 0
    %354 = vmatpush2.bf16.msra.mxu0 0
    %355 = vmatprep.subr.bf16.mxu0 0
    %356 = vmatpush2.bf16.msra.mxu0 %v260
    %357 = vmatprep.subr.bf16.mxu0 0
    %358 = vmatpush2.bf16.msra.mxu0 %v259
    %359 = vmatprep.subr.bf16.mxu0 0
    %360 = vmatpush2.bf16.msra.mxu0 %v258
    %361 = vmatprep.subr.bf16.mxu0 0
    %362 = vmatpush2.bf16.msra.mxu0 %v257
    %363 = vmatprep.subr.bf16.mxu0 0
    %364 = vmatpush2.bf16.msra.mxu0 %v256
    %365 = vmatprep.subr.bf16.mxu0 0
    %366 = vmatpush2.bf16.msra.mxu0 %v255
    %367 = vmatprep.mubr.bf16.mxu0 %v293
    %368 = vmatmul.mubr.bf16.gmra.mxu0 %v42
    %v369 = vpop.f32.mrf.mxu0
    %v370 = vadd.f32 %v330, %v369
    %v371 = vpop.f32.mrf.mxu0
    %v372 = vpop.f32.mrf.mxu0
    %v373 = vpop.f32.mrf.mxu0
    %374 = vdwg.mxu0
    %v375 = vmax.f32 %v370, 0.0
    %v376 = vpack.c.bf16 %v375, %v375
    %v377 = vld [vmem:[%s3] sm:$0xf]
    %v378 = vld [vmem:[%s3 + $0x4] sm:$0xf]
    %v379 = vld [vmem:[%s3 + $0x8] sm:$0xf]
    %v380 = vld [vmem:[%s3 + $0xc] sm:$0xf]
    %v381 = vld [vmem:[%s3 + $0x10] sm:$0xf]
    %v382 = vld [vmem:[%s3 + $0x14] sm:$0xf]
    %v383 = vld [vmem:[%s3 + $0x18] sm:$0xf]
    %v384 = vld [vmem:[%s3 + $0x1c] sm:$0xf]
    %v385 = vld [vmem:[%s3 + $0x20] sm:$0xf]
    %v386 = vld [vmem:[%s3 + $0x24] sm:$0xf]
    %v387 = vld [vmem:[%s3 + $0x28] sm:$0xf]
    %v388 = vld [vmem:[%s3 + $0x2c] sm:$0xf]
    %v389 = vld [vmem:[%s3 + $0x30] sm:$0xf]
    %v390 = vld [vmem:[%s3 + $0x34] sm:$0xf]
    %v391 = vld [vmem:[%s3 + $0x38] sm:$0xf]
    %v392 = vld [vmem:[%s3 + $0x3c] sm:$0xf]
    %v393 = vld [vmem:[%s4] sm:$0x1]
    %v395 = vlaneseq
    %v396 = vshrl.u32 %v395, 7
    %v397 = vsub.s32 0, %v396
    %v398 = vrot.slane %v393, %v397
    %v416 = vunpack.c.l.b16 %v377
    %v417 = vunpack.c.l.b16 %v378
    %v418 = vunpack.c.l.b16 %v379
    %v419 = vunpack.c.l.b16 %v380
    %v420 = vunpack.c.l.b16 %v381
    %v421 = vunpack.c.l.b16 %v382
    %v422 = vunpack.c.l.b16 %v383
    %v423 = vunpack.c.l.b16 %v384
    %v424 = vunpack.c.l.b16 %v385
    %v425 = vunpack.c.l.b16 %v386
    %v426 = vunpack.c.l.b16 %v387
    %v427 = vunpack.c.l.b16 %v388
    %v428 = vunpack.c.l.b16 %v389
    %v429 = vunpack.c.l.b16 %v390
    %v430 = vunpack.c.l.b16 %v391
    %v431 = vunpack.c.l.b16 %v392
    %v432 = vpack.c.b16 %v417, %v416
    %v433 = vpack.c.b16 %v419, %v418
    %v434 = vpack.c.b16 %v421, %v420
    %v435 = vpack.c.b16 %v423, %v422
    %v436 = vpack.c.b16 %v425, %v424
    %v437 = vpack.c.b16 %v427, %v426
    %v438 = vpack.c.b16 %v429, %v428
    %v439 = vpack.c.b16 %v431, %v430
    %448 = vmatprep.subr.bf16.mxu0 0
    %449 = vmatpush1.bf16.msra.mxu0 %v439
    %450 = vmatprep.subr.bf16.mxu0 0
    %451 = vmatpush1.bf16.msra.mxu0 %v438
    %452 = vmatprep.subr.bf16.mxu0 0
    %453 = vmatpush1.bf16.msra.mxu0 %v437
    %454 = vmatprep.subr.bf16.mxu0 0
    %455 = vmatpush1.bf16.msra.mxu0 %v436
    %456 = vmatprep.subr.bf16.mxu0 0
    %457 = vmatpush1.bf16.msra.mxu0 %v435
    %458 = vmatprep.subr.bf16.mxu0 0
    %459 = vmatpush1.bf16.msra.mxu0 %v434
    %460 = vmatprep.subr.bf16.mxu0 0
    %461 = vmatpush1.bf16.msra.mxu0 %v433
    %462 = vmatprep.subr.bf16.mxu0 0
    %463 = vmatpush1.bf16.msra.mxu0 %v432
    %464 = vmatprep.subr.bf16.mxu0 0
    %465 = vmatpush2.bf16.msra.mxu0 0
    %466 = vmatprep.subr.bf16.mxu0 0
    %467 = vmatpush2.bf16.msra.mxu0 0
    %468 = vmatprep.subr.bf16.mxu0 0
    %469 = vmatpush2.bf16.msra.mxu0 0
    %470 = vmatprep.subr.bf16.mxu0 0
    %471 = vmatpush2.bf16.msra.mxu0 0
    %472 = vmatprep.subr.bf16.mxu0 0
    %473 = vmatpush2.bf16.msra.mxu0 0
    %474 = vmatprep.subr.bf16.mxu0 0
    %475 = vmatpush2.bf16.msra.mxu0 0
    %476 = vmatprep.subr.bf16.mxu0 0
    %477 = vmatpush2.bf16.msra.mxu0 0
    %478 = vmatprep.subr.bf16.mxu0 0
    %479 = vmatpush2.bf16.msra.mxu0 0
    %480 = vmatprep.mubr.bf16.mxu0 0
    %481 = vmatmul.mubr.bf16.gmra.mxu0 %v376
    %v482 = vpop.f32.mrf.mxu0
    %v483 = vadd.f32 %v398, %v482
    %v484 = vpop.f32.mrf.mxu0
    %v485 = vpop.f32.mrf.mxu0
    %v486 = vpop.f32.mrf.mxu0
    %487 = vdwg.mxu0
    %vm488 = vcmask 64512
    %489 = vst.msk [vmem:[#allocation5] sm:$0xff] %vm488, %v483
    // Predicated region
    $region26: #{tpu_custom_call.1} parent=1 // pred_check
      _
    $region27: #{tpu_custom_call.1} parent=1 // pred_check_branch
      %491 = sbr.rel (0) target = $region29
    $region28: #{tpu_custom_call.1} parent=1 // pred_region
      %s493 = ssub.s32 128, 128
      %494 = vsyncadd [#allocation4], %s493
      %s496 = sshll.u32 [#allocation5], 4
      %s497 = int_to_ptr.vmem [resolvable:$true] %s496
      %499 = dma.vmem_to_hbm [thread:$0]  %s497, 128, %s5, [#allocation4]
    $region29: #{tpu_custom_call.1} parent=1 // pred_fallthru
      _
    // Predicated region
    $region30: #{tpu_custom_call.1} parent=1 // pred_check
      _
    $region31: #{tpu_custom_call.1} parent=1 // pred_check_branch
      %501 = sbr.rel (0) target = $region33
    $region32: #{tpu_custom_call.1} parent=1 // pred_region
      %502 = dma.done [#allocation4], 128
    $region33: #{tpu_custom_call.1} parent=1 // pred_fallthru
      _
    %503 = vsyncpa [#allocation3], 1
    %504 = vsyncpa [#allocation4], 1

</llo_original>
